<compile_context>
chip_gen: v5e
topology: v5e:2x2
jax: 0.10.0
libtpu: 0.0.40
codegen_flags: <defaults>
</compile_context>

<pallas_src>
import jax
import jax.numpy as jnp
from jax.experimental import pallas as pl
from jax.experimental.pallas import tpu as pltpu


def _round_up(x: int, m: int) -> int:
    return ((x + m - 1) // m) * m


def mlp_kernel(x_ref, w1_ref, b1_ref, w2_ref, b2_ref, o_ref):
    # Two MXU matmuls with f32 accumulation, bias adds + ReLU on the VPU.
    x = x_ref[...]
    h = jnp.dot(x, w1_ref[...], preferred_element_type=jnp.float32) + b1_ref[...]
    h = jnp.maximum(h, 0.0)  # ReLU
    y = jnp.dot(h, w2_ref[...], preferred_element_type=jnp.float32) + b2_ref[...]
    o_ref[...] = y.astype(o_ref.dtype)  # lane-dense (tm, 128k) store


def net_forward(x, w1, b1, w2, b2, *, tm=128):
    """Forward pass of Net as a single fused Pallas TPU kernel.

    x  : (B, obs_size)        float32
    w1 : (obs_size, hidden)   float32   (pre-transposed vs. PyTorch)
    b1 : (1, hidden)          float32
    w2 : (hidden, n_actions)  float32   (pre-transposed vs. PyTorch)
    b2 : (1, n_actions)       float32
    returns (B, n_actions)    float32
    """
    B, obs = x.shape
    hidden = w1.shape[1]
    n_actions = w2.shape[1]

    # Pad every contraction / lane dimension to TPU-friendly sizes.
    obs_p = _round_up(obs, 128)          # lane dim of x / sublane dim of w1
    hid_p = _round_up(hidden, 128)       # lane dim of h / sublane dim of w2
    na_p = _round_up(n_actions, 128)     # lane dim of output -> unmasked stores
    b_p = _round_up(max(B, 1), tm)       # batch packed to >=128 rows, tm per tile

    xp = jnp.pad(x, ((0, b_p - B), (0, obs_p - obs)))
    w1p = jnp.pad(w1, ((0, obs_p - obs), (0, hid_p - hidden)))
    b1p = jnp.pad(b1, ((0, 0), (0, hid_p - hidden)))
    w2p = jnp.pad(w2, ((0, hid_p - hidden), (0, na_p - n_actions)))
    b2p = jnp.pad(b2, ((0, 0), (0, na_p - n_actions)))

    grid = (b_p // tm,)

    out_p = pl.pallas_call(
        mlp_kernel,
        out_shape=jax.ShapeDtypeStruct((b_p, na_p), x.dtype),
        grid_spec=pltpu.PrefetchScalarGridSpec(
            num_scalar_prefetch=0,
            grid=grid,
            in_specs=[
                # x: tiled along the batch grid axis.
                pl.BlockSpec((tm, obs_p), lambda i: (i, 0)),
                # Weights / biases: constant index_map -> VMEM-resident across grid.
                pl.BlockSpec((obs_p, hid_p), lambda i: (0, 0)),
                pl.BlockSpec((1, hid_p), lambda i: (0, 0)),
                pl.BlockSpec((hid_p, na_p), lambda i: (0, 0)),
                pl.BlockSpec((1, na_p), lambda i: (0, 0)),
            ],
            out_specs=pl.BlockSpec((tm, na_p), lambda i: (i, 0)),
        ),
        compiler_params=pltpu.CompilerParams(
            # Batch tiles are independent -> megacore-shardable on v7x.
            dimension_semantics=("parallel",),
        ),
    )(xp, w1p, b1p, w2p, b2p)

    # Strip the padding outside the kernel.
    return out_p[:B, :n_actions]


def init_params(key, obs_size, hidden_size, n_actions):
    """Deterministic synthetic parameter init (mimics PyTorch Linear shapes)."""
    k1, k2, k3, k4 = jax.random.split(key, 4)
    # PyTorch Linear weight is (out, in); we store the transpose (in, out).
    lim1 = 1.0 / jnp.sqrt(obs_size)
    lim2 = 1.0 / jnp.sqrt(hidden_size)
    w1 = jax.random.uniform(k1, (obs_size, hidden_size), jnp.float32, -lim1, lim1)
    b1 = jax.random.uniform(k2, (1, hidden_size), jnp.float32, -lim1, lim1)
    w2 = jax.random.uniform(k3, (hidden_size, n_actions), jnp.float32, -lim2, lim2)
    b2 = jax.random.uniform(k4, (1, n_actions), jnp.float32, -lim2, lim2)
    return w1, b1, w2, b2


if __name__ == "__main__":
    # CartPole-like sizes: obs_size=4, hidden=32, n_actions=2, batch=8.
    batch, obs_size, hidden_size, n_actions = 8, 4, 32, 2

    key = jax.random.PRNGKey(0)
    kx, kp = jax.random.split(key)
    x = jax.random.normal(kx, (batch, obs_size), dtype=jnp.float32)
    w1, b1, w2, b2 = init_params(kp, obs_size, hidden_size, n_actions)

    fwd = jax.jit(net_forward)
    out = fwd(x, w1, b1, w2, b2)
    out = jax.block_until_ready(out)

    # Reference check in plain JAX (same math as the PyTorch module).
    ref = jnp.maximum(x @ w1 + b1, 0.0) @ w2 + b2
    assert out.shape == (batch, n_actions)
    assert jnp.allclose(out, ref, atol=1e-5, rtol=1e-5)

    print("KERNEL_OK")
</pallas_src>

<mosaic_0001>
module attributes {stable_mosaic.version = 11 : i64} {
  func.func @mlp_kernel(%arg0: i32, %arg1: memref<128x128xf32, #tpu.memory_space<vmem>>, %arg2: memref<128x128xf32, #tpu.memory_space<vmem>>, %arg3: memref<1x128xf32, #tpu.memory_space<vmem>>, %arg4: memref<128x128xf32, #tpu.memory_space<vmem>>, %arg5: memref<1x128xf32, #tpu.memory_space<vmem>>, %arg6: memref<128x128xf32, #tpu.memory_space<vmem>>) attributes {dimension_semantics = [#tpu.dimension_semantics<parallel>], iteration_bounds = array<i64: 1>, scalar_prefetch = 0 : i64, scratch_operands = 0 : i64, tpu.core_type = #tpu.core_type<tc>, window_params = [{transform_indices = @transform_0, window_bounds = array<i64: 128, 128>}, {pipeline_mode = #tpu.pipeline_mode<synchronous>, transform_indices = @transform_1, window_bounds = array<i64: 128, 128>}, {pipeline_mode = #tpu.pipeline_mode<synchronous>, transform_indices = @transform_2, window_bounds = array<i64: 1, 128>}, {pipeline_mode = #tpu.pipeline_mode<synchronous>, transform_indices = @transform_3, window_bounds = array<i64: 128, 128>}, {pipeline_mode = #tpu.pipeline_mode<synchronous>, transform_indices = @transform_4, window_bounds = array<i64: 1, 128>}, {transform_indices = @transform_5, window_bounds = array<i64: 128, 128>}]} {
    %c0 = arith.constant 0 : index
    %c0_0 = arith.constant 0 : index
    %0 = vector.load %arg1[%c0, %c0_0] : memref<128x128xf32, #tpu.memory_space<vmem>>, vector<128x128xf32>
    %c0_1 = arith.constant 0 : index
    %c0_2 = arith.constant 0 : index
    %1 = vector.load %arg2[%c0_1, %c0_2] : memref<128x128xf32, #tpu.memory_space<vmem>>, vector<128x128xf32>
    %cst = arith.constant dense<0.000000e+00> : vector<128x128xf32>
    %2 = tpu.matmul %0, %1, %cst {dimension_numbers = #tpu.dot_dimension_numbers<[1], [0], [0], [1], [0, 0, 1, 1], [], []>} : vector<128x128xf32>, vector<128x128xf32>, vector<128x128xf32> -> vector<128x128xf32>
    %c0_3 = arith.constant 0 : index
    %c0_4 = arith.constant 0 : index
    %3 = vector.load %arg3[%c0_3, %c0_4] : memref<1x128xf32, #tpu.memory_space<vmem>>, vector<1x128xf32>
    %4 = vector.broadcast %3 : vector<1x128xf32> to vector<128x128xf32>
    %5 = arith.addf %2, %4 : vector<128x128xf32>
    %cst_5 = arith.constant 0.000000e+00 : f32
    %6 = vector.broadcast %cst_5 : f32 to vector<128x128xf32>
    %7 = arith.maximumf %5, %6 : vector<128x128xf32>
    %c0_6 = arith.constant 0 : index
    %c0_7 = arith.constant 0 : index
    %8 = vector.load %arg4[%c0_6, %c0_7] : memref<128x128xf32, #tpu.memory_space<vmem>>, vector<128x128xf32>
    %cst_8 = arith.constant dense<0.000000e+00> : vector<128x128xf32>
    %9 = tpu.matmul %7, %8, %cst_8 {dimension_numbers = #tpu.dot_dimension_numbers<[1], [0], [0], [1], [0, 0, 1, 1], [], []>} : vector<128x128xf32>, vector<128x128xf32>, vector<128x128xf32> -> vector<128x128xf32>
    %c0_9 = arith.constant 0 : index
    %c0_10 = arith.constant 0 : index
    %10 = vector.load %arg5[%c0_9, %c0_10] : memref<1x128xf32, #tpu.memory_space<vmem>>, vector<1x128xf32>
    %11 = vector.broadcast %10 : vector<1x128xf32> to vector<128x128xf32>
    %12 = arith.addf %9, %11 : vector<128x128xf32>
    %c0_11 = arith.constant 0 : index
    %c0_12 = arith.constant 0 : index
    %13 = vector.load %arg6[%c0_11, %c0_12] : memref<128x128xf32, #tpu.memory_space<vmem>>, vector<128x128xf32>
    tpu.vector_store %arg6[%c0_11, %c0_12], %12 {strides = array<i32>} : memref<128x128xf32, #tpu.memory_space<vmem>>, vector<128x128xf32>,
    return
  }
  func.func @transform_0(%arg0: i32) -> (i32, i32) {
    %c0_i32 = arith.constant 0 : i32
    %c0_i32_0 = arith.constant 0 : i32
    return %arg0, %c0_i32 : i32, i32
  }
  func.func @transform_1(%arg0: i32) -> (i32, i32) {
    %c0_i32 = arith.constant 0 : i32
    %c0_i32_0 = arith.constant 0 : i32
    %c0_i32_1 = arith.constant 0 : i32
    return %c0_i32, %c0_i32_0 : i32, i32
  }
  func.func @transform_2(%arg0: i32) -> (i32, i32) {
    %c0_i32 = arith.constant 0 : i32
    %c0_i32_0 = arith.constant 0 : i32
    %c0_i32_1 = arith.constant 0 : i32
    return %c0_i32, %c0_i32_0 : i32, i32
  }
  func.func @transform_3(%arg0: i32) -> (i32, i32) {
    %c0_i32 = arith.constant 0 : i32
    %c0_i32_0 = arith.constant 0 : i32
    %c0_i32_1 = arith.constant 0 : i32
    return %c0_i32, %c0_i32_0 : i32, i32
  }
  func.func @transform_4(%arg0: i32) -> (i32, i32) {
    %c0_i32 = arith.constant 0 : i32
    %c0_i32_0 = arith.constant 0 : i32
    %c0_i32_1 = arith.constant 0 : i32
    return %c0_i32, %c0_i32_0 : i32, i32
  }
  func.func @transform_5(%arg0: i32) -> (i32, i32) {
    %c0_i32 = arith.constant 0 : i32
    %c0_i32_0 = arith.constant 0 : i32
    return %arg0, %c0_i32 : i32, i32
  }
}

</mosaic_0001>

<llo_original>
// kernel: net_forward.1
$region0: #{net_forward.1}
  #allocation0 [shape = 'u32[]', space=smem, size = 0x4, offset = 0x4, fixed_abs, tag = 'smem constant byte address 0x4 - core index']
  #allocation1 [shape = 'u32[72,128]{1,0:T(1,128)}', space=vmem, size = 0x9000, scoped, tag = 'internal scratch']
  %s0 = inlined_call_operand.vmem [shape: f32[128,128], index: 0, kind: input, shape index: {}]
  %s1 = inlined_call_operand.vmem [shape: f32[128,128], index: 1, kind: input, shape index: {}]
  %s2 = inlined_call_operand.vmem [shape: f32[1,128], index: 2, kind: input, shape index: {}]
  %s3 = inlined_call_operand.vmem [shape: f32[128,128], index: 3, kind: input, shape index: {}]
  %s4 = inlined_call_operand.vmem [shape: f32[1,128], index: 4, kind: input, shape index: {}]
  %s5 = inlined_call_operand.vmem [shape: f32[128,128], index: 5, kind: output, shape index: {}]
  %s6 = sld [smem:[#allocation0]]
  $region30: #{net_forward.1} parent=0
    _
  %s8 = ssub.s32 1, %s6
  %s9 = scalar_select 0, %s8, %s6
  // Predicated region
  $region2: #{net_forward.1} parent=0 // pred_check
    _
  $region3: #{net_forward.1} parent=0 // pred_check_branch
    %11 = sbr.rel (0) target = $region5
  $region4: #{net_forward.1} parent=0 // pred_region
    _
  $region5: #{net_forward.1} parent=0 // pred_fallthru
    _
  // Predicated region
  $region6: #{net_forward.1} parent=0 // pred_check
    _
  $region7: #{net_forward.1} parent=0 // pred_check_branch
    %13 = sbr.rel (0) target = $region9
  $region8: #{net_forward.1} parent=0 // pred_region
    _
  $region9: #{net_forward.1} parent=0 // pred_fallthru
    _
  // Predicated region
  $region10: #{net_forward.1} parent=0 // pred_check
    _
  $region11: #{net_forward.1} parent=0 // pred_check_branch
    %15 = sbr.rel (0) target = $region13
  $region12: #{net_forward.1} parent=0 // pred_region
    _
  $region13: #{net_forward.1} parent=0 // pred_fallthru
    _
  // Predicated region
  $region14: #{net_forward.1} parent=0 // pred_check
    _
  $region15: #{net_forward.1} parent=0 // pred_check_branch
    %17 = sbr.rel (0) target = $region17
  $region16: #{net_forward.1} parent=0 // pred_region
    _
  $region17: #{net_forward.1} parent=0 // pred_fallthru
    _
  // Predicated region
  $region18: #{net_forward.1} parent=0 // pred_check
    _
  $region19: #{net_forward.1} parent=0 // pred_check_branch
    %19 = sbr.rel (0) target = $region21
  $region20: #{net_forward.1} parent=0 // pred_region
    _
  $region21: #{net_forward.1} parent=0 // pred_fallthru
    _
  %v20 = vld [vmem:[%s0] sm:$0xff]
  %v21 = vld [vmem:[%s0 + $0x8] sm:$0xff]
  %v22 = vld [vmem:[%s0 + $0x10] sm:$0xff]
  %v23 = vld [vmem:[%s0 + $0x18] sm:$0xff]
  %v24 = vld [vmem:[%s0 + $0x20] sm:$0xff]
  %v25 = vld [vmem:[%s0 + $0x28] sm:$0xff]
  %v26 = vld [vmem:[%s0 + $0x30] sm:$0xff]
  %v27 = vld [vmem:[%s0 + $0x38] sm:$0xff]
  %v28 = vld [vmem:[%s0 + $0x40] sm:$0xff]
  %v29 = vld [vmem:[%s0 + $0x48] sm:$0xff]
  %v30 = vld [vmem:[%s0 + $0x50] sm:$0xff]
  %v31 = vld [vmem:[%s0 + $0x58] sm:$0xff]
  %v32 = vld [vmem:[%s0 + $0x60] sm:$0xff]
  %v33 = vld [vmem:[%s0 + $0x68] sm:$0xff]
  %v34 = vld [vmem:[%s0 + $0x70] sm:$0xff]
  %v35 = vld [vmem:[%s0 + $0x78] sm:$0xff]
  %v36 = vld [vmem:[%s1] sm:$0xff]
  %v37 = vld [vmem:[%s1 + $0x8] sm:$0xff]
  %v38 = vld [vmem:[%s1 + $0x10] sm:$0xff]
  %v39 = vld [vmem:[%s1 + $0x18] sm:$0xff]
  %v40 = vld [vmem:[%s1 + $0x20] sm:$0xff]
  %v41 = vld [vmem:[%s1 + $0x28] sm:$0xff]
  %v42 = vld [vmem:[%s1 + $0x30] sm:$0xff]
  %v43 = vld [vmem:[%s1 + $0x38] sm:$0xff]
  %v44 = vld [vmem:[%s1 + $0x40] sm:$0xff]
  %v45 = vld [vmem:[%s1 + $0x48] sm:$0xff]
  %v46 = vld [vmem:[%s1 + $0x50] sm:$0xff]
  %v47 = vld [vmem:[%s1 + $0x58] sm:$0xff]
  %v48 = vld [vmem:[%s1 + $0x60] sm:$0xff]
  %v49 = vld [vmem:[%s1 + $0x68] sm:$0xff]
  %v50 = vld [vmem:[%s1 + $0x70] sm:$0xff]
  %v51 = vld [vmem:[%s1 + $0x78] sm:$0xff]
  %v52 = vld [vmem:[%s2] sm:$0x1]
  %v54 = vperm.slane %v52, 0
  %56 = vmatpush.msra.mxu0 %v51
  %57 = vmatpush.msra.mxu0 %v50
  %58 = vmatpush.msra.mxu0 %v49
  %59 = vmatpush.msra.mxu0 %v48
  %60 = vmatpush.msra.mxu0 %v47
  %61 = vmatpush.msra.mxu0 %v46
  %62 = vmatpush.msra.mxu0 %v45
  %63 = vmatpush.msra.mxu0 %v44
  %64 = vmatpush.msra.mxu0 %v43
  %65 = vmatpush.msra.mxu0 %v42
  %66 = vmatpush.msra.mxu0 %v41
  %67 = vmatpush.msra.mxu0 %v40
  %68 = vmatpush.msra.mxu0 %v39
  %69 = vmatpush.msra.mxu0 %v38
  %70 = vmatpush.msra.mxu0 %v37
  %71 = vmatpush.msra.mxu0 %v36
  %72 = vmatmul.f32.gmra.mxu0 %v20
  %v73 = vpop.f32.mrf.mxu0
  %v74 = vadd.f32 %v54, %v73
  %75 = vmatmul.f32.gmra.mxu0 %v21
  %v76 = vpop.f32.mrf.mxu0
  %v77 = vadd.f32 %v54, %v76
  %78 = vmatmul.f32.gmra.mxu0 %v22
  %v79 = vpop.f32.mrf.mxu0
  %v80 = vadd.f32 %v54, %v79
  %81 = vmatmul.f32.gmra.mxu0 %v23
  %v82 = vpop.f32.mrf.mxu0
  %v83 = vadd.f32 %v54, %v82
  %84 = vmatmul.f32.gmra.mxu0 %v24
  %v85 = vpop.f32.mrf.mxu0
  %v86 = vadd.f32 %v54, %v85
  %87 = vmatmul.f32.gmra.mxu0 %v25
  %v88 = vpop.f32.mrf.mxu0
  %v89 = vadd.f32 %v54, %v88
  %90 = vmatmul.f32.gmra.mxu0 %v26
  %v91 = vpop.f32.mrf.mxu0
  %v92 = vadd.f32 %v54, %v91
  %93 = vmatmul.f32.gmra.mxu0 %v27
  %v94 = vpop.f32.mrf.mxu0
  %v95 = vadd.f32 %v54, %v94
  %96 = vmatmul.f32.gmra.mxu0 %v28
  %v97 = vpop.f32.mrf.mxu0
  %v98 = vadd.f32 %v54, %v97
  %99 = vmatmul.f32.gmra.mxu0 %v29
  %v100 = vpop.f32.mrf.mxu0
  %v101 = vadd.f32 %v54, %v100
  %102 = vmatmul.f32.gmra.mxu0 %v30
  %v103 = vpop.f32.mrf.mxu0
  %v104 = vadd.f32 %v54, %v103
  %105 = vmatmul.f32.gmra.mxu0 %v31
  %v106 = vpop.f32.mrf.mxu0
  %v107 = vadd.f32 %v54, %v106
  %108 = vmatmul.f32.gmra.mxu0 %v32
  %v109 = vpop.f32.mrf.mxu0
  %v110 = vadd.f32 %v54, %v109
  %111 = vmatmul.f32.gmra.mxu0 %v33
  %v112 = vpop.f32.mrf.mxu0
  %v113 = vadd.f32 %v54, %v112
  %114 = vmatmul.f32.gmra.mxu0 %v34
  %v115 = vpop.f32.mrf.mxu0
  %v116 = vadd.f32 %v54, %v115
  %117 = vmatmul.f32.gmra.mxu0 %v35
  %v118 = vpop.f32.mrf.mxu0
  %v119 = vadd.f32 %v54, %v118
  %120 = vdwg.mxu0
  %v121 = vmax.f32 %v74, 0.0
  %v122 = vmax.f32 %v77, 0.0
  %v123 = vmax.f32 %v80, 0.0
  %v124 = vmax.f32 %v83, 0.0
  %v125 = vmax.f32 %v86, 0.0
  %v126 = vmax.f32 %v89, 0.0
  %v127 = vmax.f32 %v92, 0.0
  %v128 = vmax.f32 %v95, 0.0
  %v129 = vmax.f32 %v98, 0.0
  %v130 = vmax.f32 %v101, 0.0
  %v131 = vmax.f32 %v104, 0.0
  %v132 = vmax.f32 %v107, 0.0
  %v133 = vmax.f32 %v110, 0.0
  %v134 = vmax.f32 %v113, 0.0
  %v135 = vmax.f32 %v116, 0.0
  %v136 = vmax.f32 %v119, 0.0
  %v137 = vld [vmem:[%s3] sm:$0xff]
  %v138 = vld [vmem:[%s3 + $0x8] sm:$0xff]
  %v139 = vld [vmem:[%s3 + $0x10] sm:$0xff]
  %v140 = vld [vmem:[%s3 + $0x18] sm:$0xff]
  %v141 = vld [vmem:[%s3 + $0x20] sm:$0xff]
  %v142 = vld [vmem:[%s3 + $0x28] sm:$0xff]
  %v143 = vld [vmem:[%s3 + $0x30] sm:$0xff]
  %v144 = vld [vmem:[%s3 + $0x38] sm:$0xff]
  %v145 = vld [vmem:[%s3 + $0x40] sm:$0xff]
  %v146 = vld [vmem:[%s3 + $0x48] sm:$0xff]
  %v147 = vld [vmem:[%s3 + $0x50] sm:$0xff]
  %v148 = vld [vmem:[%s3 + $0x58] sm:$0xff]
  %v149 = vld [vmem:[%s3 + $0x60] sm:$0xff]
  %v150 = vld [vmem:[%s3 + $0x68] sm:$0xff]
  %v151 = vld [vmem:[%s3 + $0x70] sm:$0xff]
  %v152 = vld [vmem:[%s3 + $0x78] sm:$0xff]
  %v153 = vld [vmem:[%s4] sm:$0x1]
  %v155 = vperm.slane %v153, 0
  %157 = vmatpush.msra.mxu0 %v152
  %158 = vmatpush.msra.mxu0 %v151
  %159 = vmatpush.msra.mxu0 %v150
  %160 = vmatpush.msra.mxu0 %v149
  %161 = vmatpush.msra.mxu0 %v148
  %162 = vmatpush.msra.mxu0 %v147
  %163 = vmatpush.msra.mxu0 %v146
  %164 = vmatpush.msra.mxu0 %v145
  %165 = vmatpush.msra.mxu0 %v144
  %166 = vmatpush.msra.mxu0 %v143
  %167 = vmatpush.msra.mxu0 %v142
  %168 = vmatpush.msra.mxu0 %v141
  %169 = vmatpush.msra.mxu0 %v140
  %170 = vmatpush.msra.mxu0 %v139
  %171 = vmatpush.msra.mxu0 %v138
  %172 = vmatpush.msra.mxu0 %v137
  %173 = vmatmul.f32.gmra.mxu0 %v121
  %v174 = vpop.f32.mrf.mxu0
  %v175 = vadd.f32 %v155, %v174
  %176 = vmatmul.f32.gmra.mxu0 %v122
  %v177 = vpop.f32.mrf.mxu0
  %v178 = vadd.f32 %v155, %v177
  %179 = vmatmul.f32.gmra.mxu0 %v123
  %v180 = vpop.f32.mrf.mxu0
  %v181 = vadd.f32 %v155, %v180
  %182 = vmatmul.f32.gmra.mxu0 %v124
  %v183 = vpop.f32.mrf.mxu0
  %v184 = vadd.f32 %v155, %v183
  %185 = vmatmul.f32.gmra.mxu0 %v125
  %v186 = vpop.f32.mrf.mxu0
  %v187 = vadd.f32 %v155, %v186
  %188 = vmatmul.f32.gmra.mxu0 %v126
  %v189 = vpop.f32.mrf.mxu0
  %v190 = vadd.f32 %v155, %v189
  %191 = vmatmul.f32.gmra.mxu0 %v127
  %v192 = vpop.f32.mrf.mxu0
  %v193 = vadd.f32 %v155, %v192
  %194 = vmatmul.f32.gmra.mxu0 %v128
  %v195 = vpop.f32.mrf.mxu0
  %v196 = vadd.f32 %v155, %v195
  %197 = vmatmul.f32.gmra.mxu0 %v129
  %v198 = vpop.f32.mrf.mxu0
  %v199 = vadd.f32 %v155, %v198
  %200 = vmatmul.f32.gmra.mxu0 %v130
  %v201 = vpop.f32.mrf.mxu0
  %v202 = vadd.f32 %v155, %v201
  %203 = vmatmul.f32.gmra.mxu0 %v131
  %v204 = vpop.f32.mrf.mxu0
  %v205 = vadd.f32 %v155, %v204
  %206 = vmatmul.f32.gmra.mxu0 %v132
  %v207 = vpop.f32.mrf.mxu0
  %v208 = vadd.f32 %v155, %v207
  %209 = vmatmul.f32.gmra.mxu0 %v133
  %v210 = vpop.f32.mrf.mxu0
  %v211 = vadd.f32 %v155, %v210
  %212 = vmatmul.f32.gmra.mxu0 %v134
  %v213 = vpop.f32.mrf.mxu0
  %v214 = vadd.f32 %v155, %v213
  %215 = vmatmul.f32.gmra.mxu0 %v135
  %v216 = vpop.f32.mrf.mxu0
  %v217 = vadd.f32 %v155, %v216
  %218 = vmatmul.f32.gmra.mxu0 %v136
  %v219 = vpop.f32.mrf.mxu0
  %v220 = vadd.f32 %v155, %v219
  %221 = vdwg.mxu0
  %222 = vst [vmem:[%s5] sm:$0xff] %v175
  %223 = vst [vmem:[%s5 + $0x8] sm:$0xff] %v178
  %224 = vst [vmem:[%s5 + $0x10] sm:$0xff] %v181
  %225 = vst [vmem:[%s5 + $0x18] sm:$0xff] %v184
  %226 = vst [vmem:[%s5 + $0x20] sm:$0xff] %v187
  %227 = vst [vmem:[%s5 + $0x28] sm:$0xff] %v190
  %228 = vst [vmem:[%s5 + $0x30] sm:$0xff] %v193
  %229 = vst [vmem:[%s5 + $0x38] sm:$0xff] %v196
  %230 = vst [vmem:[%s5 + $0x40] sm:$0xff] %v199
  %231 = vst [vmem:[%s5 + $0x48] sm:$0xff] %v202
  %232 = vst [vmem:[%s5 + $0x50] sm:$0xff] %v205
  %233 = vst [vmem:[%s5 + $0x58] sm:$0xff] %v208
  %234 = vst [vmem:[%s5 + $0x60] sm:$0xff] %v211
  %235 = vst [vmem:[%s5 + $0x68] sm:$0xff] %v214
  %236 = vst [vmem:[%s5 + $0x70] sm:$0xff] %v217
  %237 = vst [vmem:[%s5 + $0x78] sm:$0xff] %v220
  // Predicated region
  $region22: #{net_forward.1} parent=0 // pred_check
    _
  $region23: #{net_forward.1} parent=0 // pred_check_branch
    %239 = sbr.rel (0) target = $region25
  $region24: #{net_forward.1} parent=0 // pred_region
    _
  $region25: #{net_forward.1} parent=0 // pred_fallthru
    _
  // Predicated region
  $region26: #{net_forward.1} parent=0 // pred_check
    _
  $region27: #{net_forward.1} parent=0 // pred_check_branch
    %241 = sbr.rel (0) target = $region29
  $region28: #{net_forward.1} parent=0 // pred_region
    _
  $region29: #{net_forward.1} parent=0 // pred_fallthru
    _

</llo_original>
